<compile_context>
chip_gen: v7x
topology: tpu7x:2x2x1
jax: 0.10.0
libtpu: 0.0.40
codegen_flags: <defaults>
</compile_context>

<pallas_src>
import jax
import jax.numpy as jnp
from jax.experimental import pallas as pl
from jax.experimental.pallas import tpu as pltpu


def _round_up(a, b):
    return ((a + b - 1) // b) * b


def _cdiv(a, b):
    return (a + b - 1) // b


# Conservative working-set budget (v7x has 64 MiB VMEM per TensorCore).
_VMEM_BUDGET = 40 * 1024 * 1024
_VMEM_LIMIT = 48 * 1024 * 1024


def _vmem_footprint(tile_b, D_pad, tH, C_pad, itemsize):
    """Double-buffered VMEM bytes for one grid step's tiles (output kept in f32)."""
    return 2 * (tile_b * D_pad * itemsize      # x tile
                + D_pad * tH * itemsize        # W1 slice
                + tH * 4                       # b1 slice (f32)
                + tH * C_pad * itemsize        # W2 slice
                + C_pad * 4                    # b2 (f32)
                + tile_b * C_pad * 4)          # output tile (f32, accumulator)


def mlp_kernel(x_ref, w1_ref, b1_ref, w2_ref, b2_ref, o_ref):
    j = pl.program_id(1)  # hidden-dim tile index (reduction axis, innermost)

    # hidden tile: relu(x @ W1[:, jH:(j+1)H] + b1_tile)  -- bf16 MXU, f32 accumulate
    h = jnp.dot(x_ref[...], w1_ref[...], preferred_element_type=jnp.float32)
    h = jnp.maximum(h + b1_ref[...], 0.0)        # bias add + ReLU in f32 (VPU)
    # dropout(p=0.5) -> identity in eval mode

    # partial second matmul for this hidden slice, accumulated into the resident
    # f32 output block (b2 folded in on the first slice).
    partial = jnp.dot(h.astype(w2_ref.dtype), w2_ref[...],
                      preferred_element_type=jnp.float32)

    @pl.when(j == 0)
    def _():
        o_ref[...] = partial + b2_ref[...]

    @pl.when(j > 0)
    def _():
        o_ref[...] += partial


def prepare_params(w1, b1, w2, b2, *, matmul_dtype=jnp.bfloat16,
                   tile_hidden=512, nominal_tile_b=256):
    """One-time setup: pad feature dims to lane-dense multiples of 128 and cast
    weights to the matmul dtype.  w1: (D,H), b1: (1,H)/(H,), w2: (H,C), b2: (1,C)/(C,)."""
    D, H = w1.shape
    H2, C = w2.shape
    assert H2 == H, "w1/w2 hidden dims mismatch"

    D_pad = _round_up(D, 128)
    C_pad = _round_up(C, 128)
    H128 = _round_up(H, 128)
    itemsize = jnp.dtype(matmul_dtype).itemsize

    # Hidden tile: keep the full hidden dim (weights resident across the whole
    # grid -> DMA'd once) if the footprint fits; otherwise stream lane-dense
    # slices sized to the VMEM budget.
    tH = H128
    if _vmem_footprint(nominal_tile_b, D_pad, tH, C_pad, itemsize) > _VMEM_BUDGET:
        tH = min(_round_up(tile_hidden, 128), H128)
        while tH > 128 and _vmem_footprint(nominal_tile_b, D_pad, tH, C_pad,
                                           itemsize) > _VMEM_BUDGET:
            tH -= 128
    # Pad H UP to a multiple of tH (padded cols: b1=0 -> ReLU(0)=0, W2 rows=0 -> no-op).
    H_pad = _round_up(H128, tH)

    f32 = jnp.float32
    w1_p = jnp.zeros((D_pad, H_pad), matmul_dtype).at[:D, :H].set(w1.astype(matmul_dtype))
    w2_p = jnp.zeros((H_pad, C_pad), matmul_dtype).at[:H, :C].set(w2.astype(matmul_dtype))
    b1_p = jnp.zeros((1, H_pad), f32).at[:, :H].set(jnp.reshape(b1, (1, H)).astype(f32))
    b2_p = jnp.zeros((1, C_pad), f32).at[:, :C].set(jnp.reshape(b2, (1, C)).astype(f32))

    return dict(w1=w1_p, b1=b1_p, w2=w2_p, b2=b2_p,
                D=D, H=H, C=C, D_pad=D_pad, H_pad=H_pad, C_pad=C_pad,
                tH=tH, matmul_dtype=matmul_dtype)


def mlp_forward(x, params, *, tile_batch=256):
    """x: (N, D) f32. Returns (N, C) in x.dtype."""
    N, D = x.shape
    assert D == params["D"], "input feature dim mismatch"
    D_pad, H_pad, C_pad = params["D_pad"], params["H_pad"], params["C_pad"]
    tH = params["tH"]
    C = params["C"]
    mm_dtype = params["matmul_dtype"]
    itemsize = jnp.dtype(mm_dtype).itemsize

    # Batch tile: big (default 256), multiple of 16 (bf16 sublane packing), clamped to N.
    tile_b = min(_round_up(tile_batch, 16), _round_up(N, 16))
    # Give v7x's second TensorCore work: avoid a single batch tile when N is large
    # enough to split.
    if tile_b > 128 and N > 128 and _cdiv(N, tile_b) < 2:
        tile_b = max(128, _round_up(_cdiv(N, 2), 16))
    # Shrink if the footprint would blow the VMEM budget (large D/C).
    while tile_b > 16 and _vmem_footprint(tile_b, D_pad, tH, C_pad, itemsize) > _VMEM_BUDGET:
        tile_b = max(16, _round_up(tile_b // 2, 16))
    N_pad = _round_up(N, tile_b)

    # Single padded copy of x, cast directly into the matmul dtype.
    x_p = jnp.zeros((N_pad, D_pad), mm_dtype).at[:N, :D].set(x.astype(mm_dtype))

    grid = (N_pad // tile_b, H_pad // tH)
    weights_resident = grid[1] == 1
    weight_fetches = 1 if weights_resident else grid[0]

    flops = 2 * N_pad * (D_pad * H_pad + H_pad * C_pad)
    bytes_accessed = (N_pad * D_pad * itemsize
                      + weight_fetches * (D_pad * H_pad + H_pad * C_pad) * itemsize
                      + (H_pad + C_pad) * 4
                      + N_pad * C_pad * 4)
    cost = pl.CostEstimate(flops=flops, transcendentals=0,
                           bytes_accessed=bytes_accessed)

    out_p = pl.pallas_call(
        mlp_kernel,
        out_shape=jax.ShapeDtypeStruct((N_pad, C_pad), jnp.float32),
        grid_spec=pltpu.PrefetchScalarGridSpec(
            num_scalar_prefetch=0,
            grid=grid,
            in_specs=[
                pl.BlockSpec((tile_b, D_pad), lambda i, j: (i, 0)),   # x tile (held across j)
                pl.BlockSpec((D_pad, tH),     lambda i, j: (0, j)),   # W1 hidden slice
                pl.BlockSpec((1, tH),         lambda i, j: (0, j)),   # b1 hidden slice
                pl.BlockSpec((tH, C_pad),     lambda i, j: (j, 0)),   # W2 hidden slice
                pl.BlockSpec((1, C_pad),      lambda i, j: (0, 0)),   # b2 (resident)
            ],
            out_specs=pl.BlockSpec((tile_b, C_pad), lambda i, j: (i, 0)),
        ),
        compiler_params=pltpu.CompilerParams(
            dimension_semantics=("parallel", "arbitrary"),
            vmem_limit_bytes=_VMEM_LIMIT,
        ),
        cost_estimate=cost,
    )(x_p, params["w1"], params["b1"], params["w2"], params["b2"])

    return out_p[:N, :C].astype(x.dtype)


def init_params(key, input_size, hidden_size, num_classes):
    """Mirror the PyTorch module: weights <- torch.nn.init.ones_, biases <- default
    Linear init (uniform(-1/sqrt(fan_in), 1/sqrt(fan_in))). Weights stored as (in, out)."""
    k1, k2 = jax.random.split(key)
    w1 = jnp.ones((input_size, hidden_size), dtype=jnp.float32)
    w2 = jnp.ones((hidden_size, num_classes), dtype=jnp.float32)
    bound1 = 1.0 / (input_size ** 0.5)
    bound2 = 1.0 / (hidden_size ** 0.5)
    b1 = jax.random.uniform(k1, (1, hidden_size), jnp.float32, -bound1, bound1)
    b2 = jax.random.uniform(k2, (1, num_classes), jnp.float32, -bound2, bound2)
    return w1, b1, w2, b2


if __name__ == "__main__":
    # Small shapes consistent with the module's forward: x is (batch, input_size).
    batch, input_size, hidden_size, num_classes = 8, 16, 32, 8

    key = jax.random.PRNGKey(0)
    kx, kp = jax.random.split(key)
    x = jax.random.normal(kx, (batch, input_size), dtype=jnp.float32)
    w1, b1, w2, b2 = init_params(kp, input_size, hidden_size, num_classes)

    params = prepare_params(w1, b1, w2, b2)          # one-time pad + cast
    out = mlp_forward(x, params)
    out = jax.block_until_ready(out)

    # Pure-f32 reference (true module semantics); loose tolerance covers the
    # kernel's bf16-input / f32-accumulate MXU path.
    hp = jax.lax.Precision.HIGHEST
    h_ref = jnp.maximum(jnp.dot(x, w1, precision=hp) + b1, 0.0)
    ref = jnp.dot(h_ref, w2, precision=hp) + b2

    assert out.shape == (batch, num_classes)
    assert jnp.allclose(out, ref, atol=2e-2, rtol=2e-2), "mismatch vs f32 reference"

    print("KERNEL_OK")
</pallas_src>

<mosaic_0001>
module attributes {stable_mosaic.version = 11 : i64} {
  func.func @mlp_kernel(%arg0: i32, %arg1: i32, %arg2: memref<16x128xbf16, #tpu.memory_space<vmem>>, %arg3: memref<128x128xbf16, #tpu.memory_space<vmem>>, %arg4: memref<1x128xf32, #tpu.memory_space<vmem>>, %arg5: memref<128x128xbf16, #tpu.memory_space<vmem>>, %arg6: memref<1x128xf32, #tpu.memory_space<vmem>>, %arg7: memref<16x128xf32, #tpu.memory_space<vmem>>) attributes {dimension_semantics = [#tpu.dimension_semantics<parallel>, #tpu.dimension_semantics<arbitrary>], iteration_bounds = array<i64: 1, 1>, scalar_prefetch = 0 : i64, scratch_operands = 0 : i64, tpu.core_type = #tpu.core_type<tc>, window_params = [{transform_indices = @transform_0, window_bounds = array<i64: 16, 128>}, {transform_indices = @transform_1, window_bounds = array<i64: 128, 128>}, {transform_indices = @transform_2, window_bounds = array<i64: 1, 128>}, {transform_indices = @transform_3, window_bounds = array<i64: 128, 128>}, {pipeline_mode = #tpu.pipeline_mode<synchronous>, transform_indices = @transform_4, window_bounds = array<i64: 1, 128>}, {transform_indices = @transform_5, window_bounds = array<i64: 16, 128>}]} {
    %c0 = arith.constant 0 : index
    %c0_0 = arith.constant 0 : index
    %0 = vector.load %arg2[%c0, %c0_0] : memref<16x128xbf16, #tpu.memory_space<vmem>>, vector<16x128xbf16>
    %c0_1 = arith.constant 0 : index
    %c0_2 = arith.constant 0 : index
    %1 = vector.load %arg3[%c0_1, %c0_2] : memref<128x128xbf16, #tpu.memory_space<vmem>>, vector<128x128xbf16>
    %cst = arith.constant dense<0.000000e+00> : vector<16x128xf32>
    %2 = tpu.matmul %0, %1, %cst {dimension_numbers = #tpu.dot_dimension_numbers<[1], [0], [0], [1], [0, 0, 1, 1], [], []>} : vector<16x128xbf16>, vector<128x128xbf16>, vector<16x128xf32> -> vector<16x128xf32>
    %c0_3 = arith.constant 0 : index
    %c0_4 = arith.constant 0 : index
    %3 = vector.load %arg4[%c0_3, %c0_4] : memref<1x128xf32, #tpu.memory_space<vmem>>, vector<1x128xf32>
    %4 = vector.broadcast %3 : vector<1x128xf32> to vector<16x128xf32>
    %5 = arith.addf %2, %4 : vector<16x128xf32>
    %cst_5 = arith.constant 0.000000e+00 : f32
    %6 = vector.broadcast %cst_5 : f32 to vector<16x128xf32>
    %7 = arith.maximumf %5, %6 : vector<16x128xf32>
    %8 = arith.truncf %7 : vector<16x128xf32> to vector<16x128xbf16>
    %c0_6 = arith.constant 0 : index
    %c0_7 = arith.constant 0 : index
    %9 = vector.load %arg5[%c0_6, %c0_7] : memref<128x128xbf16, #tpu.memory_space<vmem>>, vector<128x128xbf16>
    %cst_8 = arith.constant dense<0.000000e+00> : vector<16x128xf32>
    %10 = tpu.matmul %8, %9, %cst_8 {dimension_numbers = #tpu.dot_dimension_numbers<[1], [0], [0], [1], [0, 0, 1, 1], [], []>} : vector<16x128xbf16>, vector<128x128xbf16>, vector<16x128xf32> -> vector<16x128xf32>
    %c0_i32 = arith.constant 0 : i32
    %11 = arith.cmpi eq, %arg1, %c0_i32 : i32
    %12 = arith.extui %11 : i1 to i32
    %c0_i32_9 = arith.constant 0 : i32
    %13 = arith.cmpi ne, %12, %c0_i32_9 : i32
    scf.if %13 {
      %c0_12 = arith.constant 0 : index
      %c0_13 = arith.constant 0 : index
      %17 = vector.load %arg6[%c0_12, %c0_13] : memref<1x128xf32, #tpu.memory_space<vmem>>, vector<1x128xf32>
      %18 = vector.broadcast %17 : vector<1x128xf32> to vector<16x128xf32>
      %19 = arith.addf %10, %18 : vector<16x128xf32>
      %c0_14 = arith.constant 0 : index
      %c0_15 = arith.constant 0 : index
      %20 = vector.load %arg7[%c0_14, %c0_15] : memref<16x128xf32, #tpu.memory_space<vmem>>, vector<16x128xf32>
      tpu.vector_store %arg7[%c0_14, %c0_15], %19 {strides = array<i32>} : memref<16x128xf32, #tpu.memory_space<vmem>>, vector<16x128xf32>,
    } else {
    }
    %c0_i32_10 = arith.constant 0 : i32
    %14 = arith.cmpi sgt, %arg1, %c0_i32_10 : i32
    %15 = arith.extui %14 : i1 to i32
    %c0_i32_11 = arith.constant 0 : i32
    %16 = arith.cmpi ne, %15, %c0_i32_11 : i32
    scf.if %16 {
      %c0_12 = arith.constant 0 : index
      %c0_13 = arith.constant 0 : index
      %17 = vector.load %arg7[%c0_12, %c0_13] : memref<16x128xf32, #tpu.memory_space<vmem>>, vector<16x128xf32>
      %18 = arith.addf %17, %10 : vector<16x128xf32>
      %c0_14 = arith.constant 0 : index
      %c0_15 = arith.constant 0 : index
      %19 = vector.load %arg7[%c0_14, %c0_15] : memref<16x128xf32, #tpu.memory_space<vmem>>, vector<16x128xf32>
      tpu.vector_store %arg7[%c0_14, %c0_15], %18 {strides = array<i32>} : memref<16x128xf32, #tpu.memory_space<vmem>>, vector<16x128xf32>,
    } else {
    }
    return
  }
  func.func @transform_0(%arg0: i32, %arg1: i32) -> (i32, i32) {
    %c0_i32 = arith.constant 0 : i32
    %c0_i32_0 = arith.constant 0 : i32
    return %arg0, %c0_i32 : i32, i32
  }
  func.func @transform_1(%arg0: i32, %arg1: i32) -> (i32, i32) {
    %c0_i32 = arith.constant 0 : i32
    %c0_i32_0 = arith.constant 0 : i32
    return %c0_i32, %arg1 : i32, i32
  }
  func.func @transform_2(%arg0: i32, %arg1: i32) -> (i32, i32) {
    %c0_i32 = arith.constant 0 : i32
    %c0_i32_0 = arith.constant 0 : i32
    return %c0_i32, %arg1 : i32, i32
  }
  func.func @transform_3(%arg0: i32, %arg1: i32) -> (i32, i32) {
    %c0_i32 = arith.constant 0 : i32
    %c0_i32_0 = arith.constant 0 : i32
    return %arg1, %c0_i32 : i32, i32
  }
  func.func @transform_4(%arg0: i32, %arg1: i32) -> (i32, i32) {
    %c0_i32 = arith.constant 0 : i32
    %c0_i32_0 = arith.constant 0 : i32
    %c0_i32_1 = arith.constant 0 : i32
    return %c0_i32, %c0_i32_0 : i32, i32
  }
  func.func @transform_5(%arg0: i32, %arg1: i32) -> (i32, i32) {
    %c0_i32 = arith.constant 0 : i32
    %c0_i32_0 = arith.constant 0 : i32
    return %arg0, %c0_i32 : i32, i32
  }
}

</mosaic_0001>

<llo_original>
// kernel: tpu_custom_call.1
$region0: #{tpu_custom_call.1}
  #allocation0 [shape = 'u32[]', space=smem, size = 0x4, offset = 0x4, fixed_abs, tag = 'smem constant byte address 0x4 - core index']
  #allocation1 [shape = 'u32[144,128]{1,0:T(1,128)}', space=vmem, size = 0x12000, scoped, tag = 'internal scratch']
  %s0 = inlined_call_operand.hbm [shape: bf16[16,128], index: 0, kind: input, shape index: {}]
  %s1 = inlined_call_operand.hbm [shape: bf16[128,128], index: 1, kind: input, shape index: {}]
  %s2 = inlined_call_operand.vmem [shape: f32[1,128], index: 2, kind: input, shape index: {}]
  %s3 = inlined_call_operand.hbm [shape: bf16[128,128], index: 3, kind: input, shape index: {}]
  %s4 = inlined_call_operand.vmem [shape: f32[1,128], index: 4, kind: input, shape index: {}]
  %s5 = inlined_call_operand.hbm [shape: f32[16,128], index: 5, kind: output, shape index: {}]
  %s6 = sld [smem:[#allocation0]]
  $region50: #{tpu_custom_call.1} parent=0
    _
  %s8 = ssub.s32 1, %s6
  %s9 = scalar_select 0, %s8, %s6
  $region1: #{tpu_custom_call.1} parent=0
    #allocation2 [shape = 'u8[4096]{0}', space=vmem, size = 0x1000, scoped, tag = 'input window, operand 0, single buffered']
    #allocation3 [shape = 's32[1]{0}', space=sflag, size = 0x4, scoped, tag = 'scoped memory for tpu_custom_call.1']
    #allocation4 [shape = 's32[1]{0}', space=sflag, size = 0x4, scoped, tag = 'scoped memory for tpu_custom_call.1']
    #allocation5 [shape = 'u8[32768]{0}', space=vmem, size = 0x8000, scoped, tag = 'input window, operand 1, single buffered']
    #allocation6 [shape = 's32[1]{0}', space=sflag, size = 0x4, scoped, tag = 'scoped memory for tpu_custom_call.1']
    #allocation7 [shape = 'u8[32768]{0}', space=vmem, size = 0x8000, scoped, tag = 'input window, operand 3, single buffered']
    #allocation8 [shape = 'u8[8192]{0}', space=vmem, size = 0x2000, scoped, tag = 'output window, operand 0, single buffered']
    %10 = vsyncpa [#allocation3], 0
    %11 = vsyncpa [#allocation6], 0
    %12 = vsyncpa [#allocation4], 0
    // Predicated region
    $region2: #{tpu_custom_call.1} parent=1 // pred_check
      _
    $region3: #{tpu_custom_call.1} parent=1 // pred_check_branch
      %14 = sbr.rel (0) target = $region5
    $region4: #{tpu_custom_call.1} parent=1 // pred_region
      %s16 = ssub.s32 128, 128
      %17 = vsyncadd [#allocation3], %s16
      %s18 = sshll.u32 [#allocation2], 4
      %s19 = int_to_ptr.vmem [resolvable:$true] %s18
      %24 = dma.hbm_to_vmem [thread:$0]  %s0, 128, %s19, [#allocation3], 64, 64, 4
    $region5: #{tpu_custom_call.1} parent=1 // pred_fallthru
      _
    // Predicated region
    $region6: #{tpu_custom_call.1} parent=1 // pred_check
      _
    $region7: #{tpu_custom_call.1} parent=1 // pred_check_branch
      %26 = sbr.rel (0) target = $region9
    $region8: #{tpu_custom_call.1} parent=1 // pred_region
      %s28 = ssub.s32 1024, 1024
      %29 = vsyncadd [#allocation6], %s28
      %s30 = sshll.u32 [#allocation5], 4
      %s31 = int_to_ptr.vmem [resolvable:$true] %s30
      %36 = dma.hbm_to_vmem [thread:$0]  %s1, 1024, %s31, [#allocation6], 64, 64, 4
    $region9: #{tpu_custom_call.1} parent=1 // pred_fallthru
      _
    // Predicated region
    $region10: #{tpu_custom_call.1} parent=1 // pred_check
      _
    $region11: #{tpu_custom_call.1} parent=1 // pred_check_branch
      %38 = sbr.rel (0) target = $region13
    $region12: #{tpu_custom_call.1} parent=1 // pred_region
      _
    $region13: #{tpu_custom_call.1} parent=1 // pred_fallthru
      _
    // Predicated region
    $region14: #{tpu_custom_call.1} parent=1 // pred_check
      _
    $region15: #{tpu_custom_call.1} parent=1 // pred_check_branch
      %40 = sbr.rel (0) target = $region17
    $region16: #{tpu_custom_call.1} parent=1 // pred_region
      %s42 = ssub.s32 1024, 1024
      %43 = vsyncadd [#allocation6], %s42
      %s44 = sshll.u32 [#allocation7], 4
      %s45 = int_to_ptr.vmem [resolvable:$true] %s44
      %50 = dma.hbm_to_vmem [thread:$0]  %s3, 1024, %s45, [#allocation6], 64, 64, 4
    $region17: #{tpu_custom_call.1} parent=1 // pred_fallthru
      _
    // Predicated region
    $region18: #{tpu_custom_call.1} parent=1 // pred_check
      _
    $region19: #{tpu_custom_call.1} parent=1 // pred_check_branch
      %52 = sbr.rel (0) target = $region21
    $region20: #{tpu_custom_call.1} parent=1 // pred_region
      _
    $region21: #{tpu_custom_call.1} parent=1 // pred_fallthru
      _
    // Predicated region
    $region22: #{tpu_custom_call.1} parent=1 // pred_check
      _
    $region23: #{tpu_custom_call.1} parent=1 // pred_check_branch
      %54 = sbr.rel (0) target = $region25
    $region24: #{tpu_custom_call.1} parent=1 // pred_region
      %55 = dma.done [#allocation3], 128
    $region25: #{tpu_custom_call.1} parent=1 // pred_fallthru
      _
    // Predicated region
    $region26: #{tpu_custom_call.1} parent=1 // pred_check
      _
    $region27: #{tpu_custom_call.1} parent=1 // pred_check_branch
      %57 = sbr.rel (0) target = $region29
    $region28: #{tpu_custom_call.1} parent=1 // pred_region
      %58 = dma.done [#allocation6], 1024
    $region29: #{tpu_custom_call.1} parent=1 // pred_fallthru
      _
    // Predicated region
    $region30: #{tpu_custom_call.1} parent=1 // pred_check
      _
    $region31: #{tpu_custom_call.1} parent=1 // pred_check_branch
      %60 = sbr.rel (0) target = $region33
    $region32: #{tpu_custom_call.1} parent=1 // pred_region
      %61 = dma.done [#allocation6], 1024
    $region33: #{tpu_custom_call.1} parent=1 // pred_fallthru
      _
    %v63 = vld [vmem:[#allocation2] sm:$0xf]
    %v64 = vld [vmem:[#allocation2 + $0x4] sm:$0xf]
    %v65 = vld [vmem:[#allocation5] sm:$0xf]
    %v66 = vld [vmem:[#allocation5 + $0x4] sm:$0xf]
    %v67 = vld [vmem:[#allocation5 + $0x8] sm:$0xf]
    %v68 = vld [vmem:[#allocation5 + $0xc] sm:$0xf]
    %v69 = vld [vmem:[#allocation5 + $0x10] sm:$0xf]
    %v70 = vld [vmem:[#allocation5 + $0x14] sm:$0xf]
    %v71 = vld [vmem:[#allocation5 + $0x18] sm:$0xf]
    %v72 = vld [vmem:[#allocation5 + $0x1c] sm:$0xf]
    %v73 = vld [vmem:[#allocation5 + $0x20] sm:$0xf]
    %v74 = vld [vmem:[#allocation5 + $0x24] sm:$0xf]
    %v75 = vld [vmem:[#allocation5 + $0x28] sm:$0xf]
    %v76 = vld [vmem:[#allocation5 + $0x2c] sm:$0xf]
    %v77 = vld [vmem:[#allocation5 + $0x30] sm:$0xf]
    %v78 = vld [vmem:[#allocation5 + $0x34] sm:$0xf]
    %v79 = vld [vmem:[#allocation5 + $0x38] sm:$0xf]
    %v80 = vld [vmem:[#allocation5 + $0x3c] sm:$0xf]
    %v81 = vld [vmem:[%s2] sm:$0x1]
    %v83 = vlaneseq
    %v84 = vshrl.u32 %v83, 7
    %v85 = vsub.s32 0, %v84
    %v86 = vrot.slane %v81, %v85
    %v90 = vunpack.c.l.b16 %v63
    %v91 = vunpack.c.l.b16 %v64
    %v92 = vpack.c.b16 %v91, %v90
    %v110 = vunpack.c.l.b16 %v65
    %v111 = vunpack.c.l.b16 %v66
    %v112 = vunpack.c.l.b16 %v67
    %v113 = vunpack.c.l.b16 %v68
    %v114 = vunpack.c.l.b16 %v69
    %v115 = vunpack.c.l.b16 %v70
    %v116 = vunpack.c.l.b16 %v71
    %v117 = vunpack.c.l.b16 %v72
    %v118 = vunpack.c.l.b16 %v73
    %v119 = vunpack.c.l.b16 %v74
    %v120 = vunpack.c.l.b16 %v75
    %v121 = vunpack.c.l.b16 %v76
    %v122 = vunpack.c.l.b16 %v77
    %v123 = vunpack.c.l.b16 %v78
    %v124 = vunpack.c.l.b16 %v79
    %v125 = vunpack.c.l.b16 %v80
    %v126 = vpack.c.b16 %v111, %v110
    %v127 = vpack.c.b16 %v113, %v112
    %v128 = vpack.c.b16 %v115, %v114
    %v129 = vpack.c.b16 %v117, %v116
    %v130 = vpack.c.b16 %v119, %v118
    %v131 = vpack.c.b16 %v121, %v120
    %v132 = vpack.c.b16 %v123, %v122
    %v133 = vpack.c.b16 %v125, %v124
    %142 = vmatprep.subr.bf16.mxu0 0
    %143 = vmatpush1.bf16.msra.mxu0 %v126
    %144 = vmatprep.subr.bf16.mxu0 0
    %145 = vmatpush1.bf16.msra.mxu0 %v127
    %146 = vmatprep.subr.bf16.mxu0 0
    %147 = vmatpush1.bf16.msra.mxu0 %v128
    %148 = vmatprep.subr.bf16.mxu0 0
    %149 = vmatpush1.bf16.msra.mxu0 %v129
    %150 = vmatprep.subr.bf16.mxu0 0
    %151 = vmatpush1.bf16.msra.mxu0 %v130
    %152 = vmatprep.subr.bf16.mxu0 0
    %153 = vmatpush1.bf16.msra.mxu0 %v131
    %154 = vmatprep.subr.bf16.mxu0 0
    %155 = vmatpush1.bf16.msra.mxu0 %v132
    %156 = vmatprep.subr.bf16.mxu0 0
    %157 = vmatpush1.bf16.msra.mxu0 %v133
    %158 = vmatprep.subr.bf16.mxu0 0
    %159 = vmatpush1.bf16.msra.mxu0 0
    %160 = vmatprep.subr.bf16.mxu0 0
    %161 = vmatpush1.bf16.msra.mxu0 0
    %162 = vmatprep.subr.bf16.mxu0 0
    %163 = vmatpush1.bf16.msra.mxu0 0
    %164 = vmatprep.subr.bf16.mxu0 0
    %165 = vmatpush1.bf16.msra.mxu0 0
    %166 = vmatprep.subr.bf16.mxu0 0
    %167 = vmatpush1.bf16.msra.mxu0 0
    %168 = vmatprep.subr.bf16.mxu0 0
    %169 = vmatpush1.bf16.msra.mxu0 0
    %170 = vmatprep.subr.bf16.mxu0 0
    %171 = vmatpush1.bf16.msra.mxu0 0
    %172 = vmatprep.subr.bf16.mxu0 0
    %173 = vmatpush1.bf16.msra.mxu0 0
    %174 = vmatprep.mubr.bf16.mxu0 0
    %175 = vmatmul.mubr.bf16.gmra.mrb[0].mxu0 %v92
    %v176 = vpop.f32.mrb[0].mxu0
    %v177 = vadd.f32 %v86, %v176
    %v178 = vpop.f32.mrb[0].mxu0
    %v179 = vpop.f32.mrb[0].mxu0
    %v180 = vadd.f32 %v86, %v179
    %v181 = vpop.f32.mrb[0].mxu0
    %182 = vdwg.mxu0
    %v183 = vmax.f32 %v177, 0.0
    %v184 = vmax.f32 %v180, 0.0
    %v185 = vpack.c.bf16 %v184, %v183
    %v186 = vld [vmem:[#allocation7] sm:$0xf]
    %v187 = vld [vmem:[#allocation7 + $0x4] sm:$0xf]
    %v188 = vld [vmem:[#allocation7 + $0x8] sm:$0xf]
    %v189 = vld [vmem:[#allocation7 + $0xc] sm:$0xf]
    %v190 = vld [vmem:[#allocation7 + $0x10] sm:$0xf]
    %v191 = vld [vmem:[#allocation7 + $0x14] sm:$0xf]
    %v192 = vld [vmem:[#allocation7 + $0x18] sm:$0xf]
    %v193 = vld [vmem:[#allocation7 + $0x1c] sm:$0xf]
    %v194 = vld [vmem:[#allocation7 + $0x20] sm:$0xf]
    %v195 = vld [vmem:[#allocation7 + $0x24] sm:$0xf]
    %v196 = vld [vmem:[#allocation7 + $0x28] sm:$0xf]
    %v197 = vld [vmem:[#allocation7 + $0x2c] sm:$0xf]
    %v198 = vld [vmem:[#allocation7 + $0x30] sm:$0xf]
    %v199 = vld [vmem:[#allocation7 + $0x34] sm:$0xf]
    %v200 = vld [vmem:[#allocation7 + $0x38] sm:$0xf]
    %v201 = vld [vmem:[#allocation7 + $0x3c] sm:$0xf]
    %v218 = vunpack.c.l.b16 %v186
    %v219 = vunpack.c.l.b16 %v187
    %v220 = vunpack.c.l.b16 %v188
    %v221 = vunpack.c.l.b16 %v189
    %v222 = vunpack.c.l.b16 %v190
    %v223 = vunpack.c.l.b16 %v191
    %v224 = vunpack.c.l.b16 %v192
    %v225 = vunpack.c.l.b16 %v193
    %v226 = vunpack.c.l.b16 %v194
    %v227 = vunpack.c.l.b16 %v195
    %v228 = vunpack.c.l.b16 %v196
    %v229 = vunpack.c.l.b16 %v197
    %v230 = vunpack.c.l.b16 %v198
    %v231 = vunpack.c.l.b16 %v199
    %v232 = vunpack.c.l.b16 %v200
    %v233 = vunpack.c.l.b16 %v201
    %v234 = vpack.c.b16 %v219, %v218
    %v235 = vpack.c.b16 %v221, %v220
    %v236 = vpack.c.b16 %v223, %v222
    %v237 = vpack.c.b16 %v225, %v224
    %v238 = vpack.c.b16 %v227, %v226
    %v239 = vpack.c.b16 %v229, %v228
    %v240 = vpack.c.b16 %v231, %v230
    %v241 = vpack.c.b16 %v233, %v232
    %250 = vmatprep.subr.bf16.mxu0 0
    %251 = vmatpush1.bf16.msra.mxu0 %v234
    %252 = vmatprep.subr.bf16.mxu0 0
    %253 = vmatpush1.bf16.msra.mxu0 %v235
    %254 = vmatprep.subr.bf16.mxu0 0
    %255 = vmatpush1.bf16.msra.mxu0 %v236
    %256 = vmatprep.subr.bf16.mxu0 0
    %257 = vmatpush1.bf16.msra.mxu0 %v237
    %258 = vmatprep.subr.bf16.mxu0 0
    %259 = vmatpush1.bf16.msra.mxu0 %v238
    %260 = vmatprep.subr.bf16.mxu0 0
    %261 = vmatpush1.bf16.msra.mxu0 %v239
    %262 = vmatprep.subr.bf16.mxu0 0
    %263 = vmatpush1.bf16.msra.mxu0 %v240
    %264 = vmatprep.subr.bf16.mxu0 0
    %265 = vmatpush1.bf16.msra.mxu0 %v241
    %266 = vmatprep.subr.bf16.mxu0 0
    %267 = vmatpush1.bf16.msra.mxu0 0
    %268 = vmatprep.subr.bf16.mxu0 0
    %269 = vmatpush1.bf16.msra.mxu0 0
    %270 = vmatprep.subr.bf16.mxu0 0
    %271 = vmatpush1.bf16.msra.mxu0 0
    %272 = vmatprep.subr.bf16.mxu0 0
    %273 = vmatpush1.bf16.msra.mxu0 0
    %274 = vmatprep.subr.bf16.mxu0 0
    %275 = vmatpush1.bf16.msra.mxu0 0
    %276 = vmatprep.subr.bf16.mxu0 0
    %277 = vmatpush1.bf16.msra.mxu0 0
    %278 = vmatprep.subr.bf16.mxu0 0
    %279 = vmatpush1.bf16.msra.mxu0 0
    %280 = vmatprep.subr.bf16.mxu0 0
    %281 = vmatpush1.bf16.msra.mxu0 0
    %282 = vmatprep.mubr.bf16.mxu0 0
    %283 = vmatmul.mubr.bf16.gmra.mrb[0].mxu0 %v185
    %v284 = vpop.f32.mrb[0].mxu0
    %v285 = vadd.f32 0.0, %v284
    %v286 = vpop.f32.mrb[0].mxu0
    %v287 = vpop.f32.mrb[0].mxu0
    %v288 = vadd.f32 0.0, %v287
    %v289 = vpop.f32.mrb[0].mxu0
    %290 = vdwg.mxu0
    %p291 = scmp.eq.s32.totalorder 0, 0
    // Predicated region
    $region34: #{tpu_custom_call.1} parent=1 // pred_check
      %p292 = pneg %p291
    $region35: #{tpu_custom_call.1} parent=1 // pred_check_branch
      %294 = sbr.rel (%p292) target = $region37
    $region36: #{tpu_custom_call.1} parent=1 // pred_region
      %v295 = vld [vmem:[%s4] sm:$0x1]
      %v297 = vlaneseq
      %v298 = vshrl.u32 %v297, 7
      %v299 = vsub.s32 0, %v298
      %v300 = vrot.slane %v295, %v299
      %v302 = vadd.f32 %v285, %v300
      %v303 = vadd.f32 %v288, %v300
      %304 = vst [vmem:[#allocation8] sm:$0xff] %v302
      %305 = vst [vmem:[#allocation8 + $0x8] sm:$0xff] %v303
    $region37: #{tpu_custom_call.1} parent=1 // pred_fallthru
      _
    %p306 = scmp.gt.s32.totalorder 0, 0
    // Predicated region
    $region38: #{tpu_custom_call.1} parent=1 // pred_check
      %p307 = pneg %p306
    $region39: #{tpu_custom_call.1} parent=1 // pred_check_branch
      %309 = sbr.rel (%p307) target = $region41
    $region40: #{tpu_custom_call.1} parent=1 // pred_region
      %v310 = vld [vmem:[#allocation8] sm:$0xff]
      %v311 = vld [vmem:[#allocation8 + $0x8] sm:$0xff]
      %v312 = vadd.f32 %v310, %v285
      %v313 = vadd.f32 %v311, %v288
      %314 = vst [vmem:[#allocation8] sm:$0xff] %v312
      %315 = vst [vmem:[#allocation8 + $0x8] sm:$0xff] %v313
    $region41: #{tpu_custom_call.1} parent=1 // pred_fallthru
      _
    // Predicated region
    $region42: #{tpu_custom_call.1} parent=1 // pred_check
      _
    $region43: #{tpu_custom_call.1} parent=1 // pred_check_branch
      %317 = sbr.rel (0) target = $region45
    $region44: #{tpu_custom_call.1} parent=1 // pred_region
      %s319 = ssub.s32 256, 256
      %320 = vsyncadd [#allocation4], %s319
      %s321 = sshll.u32 [#allocation8], 4
      %s322 = int_to_ptr.vmem [resolvable:$true] %s321
      %327 = dma.vmem_to_hbm [thread:$0]  %s322, 256, %s5, [#allocation4], 128, 128, 8
    $region45: #{tpu_custom_call.1} parent=1 // pred_fallthru
      _
    // Predicated region
    $region46: #{tpu_custom_call.1} parent=1 // pred_check
      _
    $region47: #{tpu_custom_call.1} parent=1 // pred_check_branch
      %329 = sbr.rel (0) target = $region49
    $region48: #{tpu_custom_call.1} parent=1 // pred_region
      %330 = dma.done [#allocation4], 256
    $region49: #{tpu_custom_call.1} parent=1 // pred_fallthru
      _
    %331 = vsyncpa [#allocation3], 1
    %332 = vsyncpa [#allocation6], 1
    %333 = vsyncpa [#allocation4], 1

</llo_original>
